<compile_context>
chip_gen: v7x
topology: tpu7x:2x2x1
jax: 0.10.0
libtpu: 0.0.40
codegen_flags: <defaults>
</compile_context>

<pallas_src>
import functools

import jax
import jax.numpy as jnp
import numpy as np
from jax.experimental import pallas as pl
from jax.experimental.pallas import tpu as pltpu


def _club_kernel(xt_ref, yt_ref, w1t_ref, b1t_ref, w2t_ref, b2t_ref,
                 ybar_ref, yvar_ref, out_ref, acc_ref,
                 *, y_dim, scale, matmul_dtype):
    i = pl.program_id(0)

    @pl.when(i == 0)
    def _init():
        acc_ref[...] = jnp.zeros_like(acc_ref)

    xt = xt_ref[...]                                   # [x_dim, T]  matmul dtype
    yt = yt_ref[...]                                   # [y_dim, T]  f32

    # ---- q(Y|X) network in transposed (lane-dense) layout: 2 MXU pushes ----
    # layer 1: h^T = relu([W1_mu | W1_lv]^T @ x^T + b1^T)        -> [2*h2, T]
    h = jnp.maximum(
        jnp.dot(w1t_ref[...], xt, preferred_element_type=jnp.float32)
        + b1t_ref[...], 0.0)
    # layer 2 (block-diagonal W2): z^T = W2^T @ h^T + b2^T       -> [2*y_dim, T]
    z = jnp.dot(w2t_ref[...], h.astype(matmul_dtype),
                preferred_element_type=jnp.float32) + b2t_ref[...]

    mu = z[:y_dim, :]                  # sublane-aligned slice    [y_dim, T]
    logvar = jnp.tanh(z[y_dim:, :])    # sublane-aligned slice    [y_dim, T]
    inv_var = jnp.exp(-logvar)

    # ---- (positive - negative) per element, mean-centered form ----
    #   (mu - y)^2 - mean_j (y_j - mu)^2 = yc^2 - var_y - 2*(mu - ybar)*yc
    yc = yt - ybar_ref[...]
    mu_c = mu - ybar_ref[...]
    acc_ref[...] += inv_var * (yc * yc - yvar_ref[...] - 2.0 * mu_c * yc)

    @pl.when(i == pl.num_programs(0) - 1)
    def _finalize():
        out_ref[...] = jnp.sum(acc_ref[...], keepdims=True) * scale


def _pick_tile(n, tile_n):
    if n <= tile_n:
        return n
    t = (min(tile_n, n) // 128) * 128
    while t >= 128 and n % t != 0:
        t -= 128
    if t < 128:
        raise ValueError(
            f"N={n} has no row tile <= {tile_n} that is a multiple of 128")
    return t


@functools.partial(jax.jit, static_argnames=("tile_n", "matmul_dtype"))
def club_forward(x, y, params, *, tile_n=1024, matmul_dtype=jnp.float32):
    (w1m, b1m, w2m, b2m, w1v, b1v, w2v, b2v) = params
    n, x_dim = x.shape
    y_dim = y.shape[1]
    h2 = w1m.shape[1]

    tile = _pick_tile(n, tile_n)

    # ---- wrapper-side layout plumbing: transposed inputs, packed weights ----
    xt = x.astype(matmul_dtype).T                                       # [x_dim, N]
    yt = y.astype(jnp.float32).T                                        # [y_dim, N]

    w1t = jnp.concatenate([w1m, w1v], axis=1).T.astype(matmul_dtype)    # [2*h2, x_dim]
    b1t = jnp.concatenate([b1m, b1v], axis=1).T.astype(jnp.float32)     # [2*h2, 1]
    zer = jnp.zeros((y_dim, h2), w2m.dtype)
    w2t = jnp.concatenate(
        [jnp.concatenate([w2m.T, zer], axis=1),
         jnp.concatenate([zer, w2v.T], axis=1)],
        axis=0).astype(matmul_dtype)                                    # [2*y_dim, 2*h2]
    b2t = jnp.concatenate([b2m, b2v], axis=1).T.astype(jnp.float32)     # [2*y_dim, 1]

    # global y statistics for the O(N) negative term (mean-centered)
    ybar = jnp.mean(yt, axis=1, keepdims=True)                          # [y_dim, 1]
    yvar = jnp.mean((yt - ybar) ** 2, axis=1, keepdims=True)            # [y_dim, 1]

    kernel = functools.partial(_club_kernel, y_dim=y_dim, scale=-0.5 / n,
                               matmul_dtype=matmul_dtype)

    def col_spec(d):        # streamed lane-dense tiles [d, tile]
        return pl.BlockSpec((d, tile), lambda i: (0, i))

    def full_spec(shape):   # small resident operands (block == full array)
        return pl.BlockSpec(shape, lambda i: (0, 0))

    out = pl.pallas_call(
        kernel,
        out_shape=jax.ShapeDtypeStruct((1, 1), jnp.float32),
        grid=(n // tile,),
        in_specs=[
            col_spec(x_dim),                  # x^T     (streamed)
            col_spec(y_dim),                  # y^T     (streamed)
            full_spec((2 * h2, x_dim)),       # packed W1^T
            full_spec((2 * h2, 1)),           # packed b1^T
            full_spec((2 * y_dim, 2 * h2)),   # block-diag W2^T
            full_spec((2 * y_dim, 1)),        # packed b2^T
            full_spec((y_dim, 1)),            # ybar
            full_spec((y_dim, 1)),            # yvar
        ],
        out_specs=pl.BlockSpec((1, 1), lambda i: (0, 0)),   # resident scalar
        scratch_shapes=[pltpu.VMEM((y_dim, tile), jnp.float32)],
        compiler_params=pltpu.CompilerParams(
            dimension_semantics=("arbitrary",),
            vmem_limit_bytes=32 * 1024 * 1024),
    )(xt, yt, w1t, b1t, w2t, b2t, ybar, yvar)
    return out[0, 0]


def init_params(key, x_dim, y_dim, hidden_size):
    h2 = hidden_size // 2
    ks = jax.random.split(key, 8)

    def lin(kw, kb, fan_in, fan_out):
        bound = 1.0 / np.sqrt(fan_in)
        w = jax.random.uniform(kw, (fan_in, fan_out), jnp.float32, -bound, bound)
        b = jax.random.uniform(kb, (1, fan_out), jnp.float32, -bound, bound)
        return w, b

    w1m, b1m = lin(ks[0], ks[1], x_dim, h2)
    w2m, b2m = lin(ks[2], ks[3], h2, y_dim)
    w1v, b1v = lin(ks[4], ks[5], x_dim, h2)
    w2v, b2v = lin(ks[6], ks[7], h2, y_dim)
    return (w1m, b1m, w2m, b2m, w1v, b1v, w2v, b2v)


def club_reference(x, y, params, matmul_dtype=jnp.float32):
    """Pure-JAX reference mirroring the PyTorch forward() (O(N^2) negative)."""
    (w1m, b1m, w2m, b2m, w1v, b1v, w2v, b2v) = params

    def dot(a, b):
        return jnp.dot(a.astype(matmul_dtype), b.astype(matmul_dtype),
                       preferred_element_type=jnp.float32)

    mu = dot(jnp.maximum(dot(x, w1m) + b1m, 0.0), w2m) + b2m
    logvar = jnp.tanh(dot(jnp.maximum(dot(x, w1v) + b1v, 0.0), w2v) + b2v)
    positive = -(mu - y) ** 2 / 2.0 / jnp.exp(logvar)
    prediction_1 = mu[:, None, :]               # [N, 1, D]
    y_samples_1 = y[None, :, :]                 # [1, N, D]
    negative = -jnp.mean((y_samples_1 - prediction_1) ** 2, axis=1) \
        / 2.0 / jnp.exp(logvar)
    return jnp.mean(positive.sum(-1) - negative.sum(-1))


if __name__ == "__main__":
    # x_samples / y_samples: [sample_size, x_dim / y_dim]
    N, X_DIM, Y_DIM, HIDDEN = 512, 16, 16, 32
    TILE_N = 128                                # 4 grid steps: exercises
                                                # init / accumulate / finalize

    key = jax.random.PRNGKey(0)
    kx, ky, kp = jax.random.split(key, 3)
    x = jax.random.normal(kx, (N, X_DIM), jnp.float32)
    y = jax.random.normal(ky, (N, Y_DIM), jnp.float32)
    params = init_params(kp, X_DIM, Y_DIM, HIDDEN)

    # f32 matmul operands: tight check against the module's f32 semantics.
    out_f32 = jax.block_until_ready(
        club_forward(x, y, params, tile_n=TILE_N, matmul_dtype=jnp.float32))
    ref_f32 = club_reference(x, y, params, jnp.float32)
    assert np.allclose(np.asarray(out_f32), np.asarray(ref_f32),
                       rtol=1e-3, atol=1e-3), (out_f32, ref_f32)

    # default (large) tile -> single-step grid path.
    out_one = jax.block_until_ready(
        club_forward(x, y, params, matmul_dtype=jnp.float32))
    assert np.allclose(np.asarray(out_one), np.asarray(ref_f32),
                       rtol=1e-3, atol=1e-3), (out_one, ref_f32)

    # bf16 matmul operands (MXU-native single pass, f32 accumulation),
    # checked against a precision-matched pure-JAX reference.
    out_bf16 = jax.block_until_ready(
        club_forward(x, y, params, tile_n=TILE_N, matmul_dtype=jnp.bfloat16))
    ref_bf16 = club_reference(x, y, params, jnp.bfloat16)
    assert np.allclose(np.asarray(out_bf16), np.asarray(ref_bf16),
                       rtol=1e-2, atol=1e-2), (out_bf16, ref_bf16)

    print("KERNEL_OK")
</pallas_src>

<mosaic_0001>
module attributes {stable_mosaic.version = 11 : i64} {
  func.func @_club_kernel(%arg0: i32, %arg1: memref<16x128xf32, #tpu.memory_space<vmem>>, %arg2: memref<16x128xf32, #tpu.memory_space<vmem>>, %arg3: memref<32x16xf32, #tpu.memory_space<vmem>>, %arg4: memref<32x1xf32, #tpu.memory_space<vmem>>, %arg5: memref<32x32xf32, #tpu.memory_space<vmem>>, %arg6: memref<32x1xf32, #tpu.memory_space<vmem>>, %arg7: memref<16x1xf32, #tpu.memory_space<vmem>>, %arg8: memref<16x1xf32, #tpu.memory_space<vmem>>, %arg9: memref<1x1xf32, #tpu.memory_space<vmem>>, %arg10: memref<16x128xf32, #tpu.memory_space<vmem>>) attributes {dimension_semantics = [#tpu.dimension_semantics<arbitrary>], iteration_bounds = array<i64: 4>, scalar_prefetch = 0 : i64, scratch_operands = 1 : i64, tpu.core_type = #tpu.core_type<tc>, window_params = [{transform_indices = @transform_0, window_bounds = array<i64: 16, 128>}, {transform_indices = @transform_1, window_bounds = array<i64: 16, 128>}, {pipeline_mode = #tpu.pipeline_mode<synchronous>, transform_indices = @transform_2, window_bounds = array<i64: 32, 16>}, {pipeline_mode = #tpu.pipeline_mode<synchronous>, transform_indices = @transform_3, window_bounds = array<i64: 32, 1>}, {pipeline_mode = #tpu.pipeline_mode<synchronous>, transform_indices = @transform_4, window_bounds = array<i64: 32, 32>}, {pipeline_mode = #tpu.pipeline_mode<synchronous>, transform_indices = @transform_5, window_bounds = array<i64: 32, 1>}, {pipeline_mode = #tpu.pipeline_mode<synchronous>, transform_indices = @transform_6, window_bounds = array<i64: 16, 1>}, {pipeline_mode = #tpu.pipeline_mode<synchronous>, transform_indices = @transform_7, window_bounds = array<i64: 16, 1>}, {pipeline_mode = #tpu.pipeline_mode<synchronous>, transform_indices = @transform_8, window_bounds = array<i64: 1, 1>}]} {
    %c0_i32 = arith.constant 0 : i32
    %0 = arith.cmpi eq, %arg0, %c0_i32 : i32
    %1 = arith.extui %0 : i1 to i32
    %c0_i32_0 = arith.constant 0 : i32
    %2 = arith.cmpi ne, %1, %c0_i32_0 : i32
    scf.if %2 {
      %cst_27 = arith.constant 0.000000e+00 : f32
      %44 = vector.broadcast %cst_27 : f32 to vector<16x128xf32>
      %c0_28 = arith.constant 0 : index
      %c0_29 = arith.constant 0 : index
      %45 = vector.load %arg10[%c0_28, %c0_29] : memref<16x128xf32, #tpu.memory_space<vmem>>, vector<16x128xf32>
      tpu.vector_store %arg10[%c0_28, %c0_29], %44 {strides = array<i32>} : memref<16x128xf32, #tpu.memory_space<vmem>>, vector<16x128xf32>,
    } else {
    }
    %c0 = arith.constant 0 : index
    %c0_1 = arith.constant 0 : index
    %3 = vector.load %arg1[%c0, %c0_1] : memref<16x128xf32, #tpu.memory_space<vmem>>, vector<16x128xf32>
    %c0_2 = arith.constant 0 : index
    %c0_3 = arith.constant 0 : index
    %4 = vector.load %arg2[%c0_2, %c0_3] : memref<16x128xf32, #tpu.memory_space<vmem>>, vector<16x128xf32>
    %c0_4 = arith.constant 0 : index
    %c0_5 = arith.constant 0 : index
    %5 = vector.load %arg3[%c0_4, %c0_5] : memref<32x16xf32, #tpu.memory_space<vmem>>, vector<32x16xf32>
    %cst = arith.constant dense<0.000000e+00> : vector<32x128xf32>
    %6 = tpu.matmul %5, %3, %cst {dimension_numbers = #tpu.dot_dimension_numbers<[1], [0], [0], [1], [0, 0, 1, 1], [], []>} : vector<32x16xf32>, vector<16x128xf32>, vector<32x128xf32> -> vector<32x128xf32>
    %c0_6 = arith.constant 0 : index
    %c0_7 = arith.constant 0 : index
    %7 = vector.load %arg4[%c0_6, %c0_7] : memref<32x1xf32, #tpu.memory_space<vmem>>, vector<32x1xf32>
    %8 = vector.broadcast %7 : vector<32x1xf32> to vector<32x128xf32>
    %9 = arith.addf %6, %8 : vector<32x128xf32>
    %cst_8 = arith.constant 0.000000e+00 : f32
    %10 = vector.broadcast %cst_8 : f32 to vector<32x128xf32>
    %11 = arith.maximumf %9, %10 : vector<32x128xf32>
    %c0_9 = arith.constant 0 : index
    %c0_10 = arith.constant 0 : index
    %12 = vector.load %arg5[%c0_9, %c0_10] : memref<32x32xf32, #tpu.memory_space<vmem>>, vector<32x32xf32>
    %cst_11 = arith.constant dense<0.000000e+00> : vector<32x128xf32>
    %13 = tpu.matmul %12, %11, %cst_11 {dimension_numbers = #tpu.dot_dimension_numbers<[1], [0], [0], [1], [0, 0, 1, 1], [], []>} : vector<32x32xf32>, vector<32x128xf32>, vector<32x128xf32> -> vector<32x128xf32>
    %c0_12 = arith.constant 0 : index
    %c0_13 = arith.constant 0 : index
    %14 = vector.load %arg6[%c0_12, %c0_13] : memref<32x1xf32, #tpu.memory_space<vmem>>, vector<32x1xf32>
    %15 = vector.broadcast %14 : vector<32x1xf32> to vector<32x128xf32>
    %16 = arith.addf %13, %15 : vector<32x128xf32>
    %17 = vector.extract_strided_slice %16 {offsets = [0, 0], sizes = [16, 128], strides = [1, 1]} : vector<32x128xf32> to vector<16x128xf32>
    %18 = vector.extract_strided_slice %16 {offsets = [16, 0], sizes = [16, 128], strides = [1, 1]} : vector<32x128xf32> to vector<16x128xf32>
    %19 = math.tanh %18 : vector<16x128xf32>
    %cst_14 = arith.constant 0.000000e+00 : f32
    %20 = vector.broadcast %cst_14 : f32 to vector<16x128xf32>
    %21 = arith.subf %20, %19 : vector<16x128xf32>
    %22 = math.exp %21 : vector<16x128xf32>
    %c0_15 = arith.constant 0 : index
    %c0_16 = arith.constant 0 : index
    %23 = vector.load %arg7[%c0_15, %c0_16] : memref<16x1xf32, #tpu.memory_space<vmem>>, vector<16x1xf32>
    %24 = vector.broadcast %23 : vector<16x1xf32> to vector<16x128xf32>
    %25 = arith.subf %4, %24 : vector<16x128xf32>
    %c0_17 = arith.constant 0 : index
    %c0_18 = arith.constant 0 : index
    %26 = vector.load %arg7[%c0_17, %c0_18] : memref<16x1xf32, #tpu.memory_space<vmem>>, vector<16x1xf32>
    %27 = vector.broadcast %26 : vector<16x1xf32> to vector<16x128xf32>
    %28 = arith.subf %17, %27 : vector<16x128xf32>
    %c0_19 = arith.constant 0 : index
    %c0_20 = arith.constant 0 : index
    %29 = vector.load %arg10[%c0_19, %c0_20] : memref<16x128xf32, #tpu.memory_space<vmem>>, vector<16x128xf32>
    %30 = arith.mulf %25, %25 : vector<16x128xf32>
    %c0_21 = arith.constant 0 : index
    %c0_22 = arith.constant 0 : index
    %31 = vector.load %arg8[%c0_21, %c0_22] : memref<16x1xf32, #tpu.memory_space<vmem>>, vector<16x1xf32>
    %32 = vector.broadcast %31 : vector<16x1xf32> to vector<16x128xf32>
    %33 = arith.subf %30, %32 : vector<16x128xf32>
    %cst_23 = arith.constant 2.000000e+00 : f32
    %34 = vector.broadcast %cst_23 : f32 to vector<16x128xf32>
    %35 = arith.mulf %34, %28 : vector<16x128xf32>
    %36 = arith.mulf %35, %25 : vector<16x128xf32>
    %37 = arith.subf %33, %36 : vector<16x128xf32>
    %38 = arith.mulf %22, %37 : vector<16x128xf32>
    %39 = arith.addf %29, %38 : vector<16x128xf32>
    %c0_24 = arith.constant 0 : index
    %c0_25 = arith.constant 0 : index
    %40 = vector.load %arg10[%c0_24, %c0_25] : memref<16x128xf32, #tpu.memory_space<vmem>>, vector<16x128xf32>
    tpu.vector_store %arg10[%c0_24, %c0_25], %39 {strides = array<i32>} : memref<16x128xf32, #tpu.memory_space<vmem>>, vector<16x128xf32>,
    %c3_i32 = arith.constant 3 : i32
    %41 = arith.cmpi eq, %arg0, %c3_i32 : i32
    %42 = arith.extui %41 : i1 to i32
    %c0_i32_26 = arith.constant 0 : i32
    %43 = arith.cmpi ne, %42, %c0_i32_26 : i32
    scf.if %43 {
      %c0_27 = arith.constant 0 : index
      %c0_28 = arith.constant 0 : index
      %44 = vector.load %arg10[%c0_27, %c0_28] : memref<16x128xf32, #tpu.memory_space<vmem>>, vector<16x128xf32>
      %45 = vector.shape_cast %44 : vector<16x128xf32> to vector<1x16x128xf32>
      %cst_29 = arith.constant dense<0.000000e+00> : vector<1xf32>
      %46 = vector.multi_reduction <add>, %45, %cst_29 [1, 2] : vector<1x16x128xf32> to vector<1xf32>
      %47 = vector.shape_cast %46 : vector<1xf32> to vector<1x1x1xf32>
      %48 = vector.extract %47[0, 0, 0] : f32 from vector<1x1x1xf32>
      %49 = vector.broadcast %48 : f32 to vector<1x1xf32>
      %cst_30 = arith.constant -9.765625E-4 : f32
      %50 = vector.broadcast %cst_30 : f32 to vector<1x1xf32>
      %51 = arith.mulf %49, %50 : vector<1x1xf32>
      %c0_31 = arith.constant 0 : index
      %c0_32 = arith.constant 0 : index
      %52 = vector.load %arg9[%c0_31, %c0_32] : memref<1x1xf32, #tpu.memory_space<vmem>>, vector<1x1xf32>
      tpu.vector_store %arg9[%c0_31, %c0_32], %51 {strides = array<i32>} : memref<1x1xf32, #tpu.memory_space<vmem>>, vector<1x1xf32>,
    } else {
    }
    return
  }
  func.func @transform_0(%arg0: i32) -> (i32, i32) {
    %c0_i32 = arith.constant 0 : i32
    %c0_i32_0 = arith.constant 0 : i32
    return %c0_i32, %arg0 : i32, i32
  }
  func.func @transform_1(%arg0: i32) -> (i32, i32) {
    %c0_i32 = arith.constant 0 : i32
    %c0_i32_0 = arith.constant 0 : i32
    return %c0_i32, %arg0 : i32, i32
  }
  func.func @transform_2(%arg0: i32) -> (i32, i32) {
    %c0_i32 = arith.constant 0 : i32
    %c0_i32_0 = arith.constant 0 : i32
    %c0_i32_1 = arith.constant 0 : i32
    return %c0_i32, %c0_i32_0 : i32, i32
  }
  func.func @transform_3(%arg0: i32) -> (i32, i32) {
    %c0_i32 = arith.constant 0 : i32
    %c0_i32_0 = arith.constant 0 : i32
    %c0_i32_1 = arith.constant 0 : i32
    return %c0_i32, %c0_i32_0 : i32, i32
  }
  func.func @transform_4(%arg0: i32) -> (i32, i32) {
    %c0_i32 = arith.constant 0 : i32
    %c0_i32_0 = arith.constant 0 : i32
    %c0_i32_1 = arith.constant 0 : i32
    return %c0_i32, %c0_i32_0 : i32, i32
  }
  func.func @transform_5(%arg0: i32) -> (i32, i32) {
    %c0_i32 = arith.constant 0 : i32
    %c0_i32_0 = arith.constant 0 : i32
    %c0_i32_1 = arith.constant 0 : i32
    return %c0_i32, %c0_i32_0 : i32, i32
  }
  func.func @transform_6(%arg0: i32) -> (i32, i32) {
    %c0_i32 = arith.constant 0 : i32
    %c0_i32_0 = arith.constant 0 : i32
    %c0_i32_1 = arith.constant 0 : i32
    return %c0_i32, %c0_i32_0 : i32, i32
  }
  func.func @transform_7(%arg0: i32) -> (i32, i32) {
    %c0_i32 = arith.constant 0 : i32
    %c0_i32_0 = arith.constant 0 : i32
    %c0_i32_1 = arith.constant 0 : i32
    return %c0_i32, %c0_i32_0 : i32, i32
  }
  func.func @transform_8(%arg0: i32) -> (i32, i32) {
    %c0_i32 = arith.constant 0 : i32
    %c0_i32_0 = arith.constant 0 : i32
    %c0_i32_1 = arith.constant 0 : i32
    return %c0_i32, %c0_i32_0 : i32, i32
  }
}

</mosaic_0001>

<llo_original>
// kernel: club_forward.1
$region0: #{club_forward.1}
  #allocation0 [shape = 'u32[]', space=smem, size = 0x4, offset = 0x4, fixed_abs, tag = 'smem constant byte address 0x4 - core index']
  #allocation1 [shape = 'u32[144,128]{1,0:T(1,128)}', space=vmem, size = 0x12000, scoped, tag = 'internal scratch']
  #allocation2 [shape = 'f32[16,128]{1,0:T(8,128)}', space=vmem, size = 0x2000, scoped, tag = 'scratch operand']
  %s0 = inlined_call_operand.vmem [shape: f32[16,512], index: 0, kind: input, shape index: {}]
  %s1 = inlined_call_operand.vmem [shape: f32[16,512], index: 1, kind: input, shape index: {}]
  %s2 = inlined_call_operand.vmem [shape: f32[32,16], index: 2, kind: input, shape index: {}]
  %s3 = inlined_call_operand.vmem [shape: f32[32,1], index: 3, kind: input, shape index: {}]
  %s4 = inlined_call_operand.vmem [shape: f32[32,32], index: 4, kind: input, shape index: {}]
  %s5 = inlined_call_operand.vmem [shape: f32[32,1], index: 5, kind: input, shape index: {}]
  %s6 = inlined_call_operand.vmem [shape: f32[16,1], index: 6, kind: input, shape index: {}]
  %s7 = inlined_call_operand.vmem [shape: f32[16,1], index: 7, kind: input, shape index: {}]
  %s8 = inlined_call_operand.hbm [shape: f32[1,1], index: 8, kind: output, shape index: {}]
  %s9 = sld [smem:[#allocation0]]
  $region149: #{club_forward.1} parent=0
    _
  %s11 = ssub.s32 1, %s9
  %s12 = scalar_select 0, %s11, %s9
  $region1: #{club_forward.1} parent=0
    #allocation3 [shape = 'u8[16384]{0}', space=vmem, size = 0x4000, scoped, tag = 'input window, operand 0']
    #allocation4 [shape = 'u8[16384]{0}', space=vmem, size = 0x4000, scoped, tag = 'input window, operand 1']
    #allocation5 [shape = 'u8[512]{0}', space=vmem, size = 0x400, scoped, tag = 'output window, operand 0, single buffered']
    #allocation6 [shape = 's32[2]{0}', space=sflag, size = 0x8, scoped, tag = 'scoped memory for club_forward.1']
    %13 = vsyncpa [#allocation6], 0
    loop: start=0, step=1, limit=6
    $region2: #{club_forward.1} parent=1 // loop_pre_header
      _
    $region3: #{club_forward.1} parent=1 // loop_header
      %s15 = sphi 0, %s19
      %p16 = scmp.ge.s32.totalorder %s15, 6
      %s25 = sphi 0, %s27
      %s28 = sphi 0, %s25
      %s29 = sphi 0, %s28
      %s45 = sphi 0, %s29
      %s51 = sphi 0, %s53
      %s54 = sphi 0, %s51
      %s55 = sphi 0, %s54
      %s71 = sphi 0, %s55
      %s75 = sphi 0, %s75
      %s77 = sphi 0, %s75
      %s78 = sphi 0, %s77
      %s92 = sphi 0, %s78
      %s96 = sphi 0, %s96
      %s98 = sphi 0, %s96
      %s99 = sphi 0, %s98
      %s113 = sphi 0, %s99
      %s117 = sphi 0, %s117
      %s119 = sphi 0, %s117
      %s120 = sphi 0, %s119
      %s134 = sphi 0, %s120
      %s138 = sphi 0, %s138
      %s140 = sphi 0, %s138
      %s141 = sphi 0, %s140
      %s155 = sphi 0, %s141
      %s159 = sphi 0, %s159
      %s161 = sphi 0, %s159
      %s162 = sphi 0, %s161
      %s176 = sphi 0, %s162
      %s180 = sphi 0, %s180
      %s182 = sphi 0, %s180
      %s183 = sphi 0, %s182
      %s197 = sphi 0, %s183
      %s201 = sphi 0, %s201
      %s203 = sphi 0, %s201
      %s204 = sphi 0, %s203
      %s218 = sphi 0, %s204
    $region4: #{club_forward.1} parent=1 // loop_header_branch
      %18 = sbr.rel (%p16) target = $region8
    $region5: #{club_forward.1} parent=1 // loop_body
      %s20 = ssub.s32 %s15, 1
      %s21 = ssub.s32 %s15, 2
      %s22 = sadd.s32 %s15, 1
      %s23 = ssub.s32 %s15, %s22
      %p24 = scmp.eq.s32.totalorder %s23, 0
      %s26 = sadd.s32 %s25, 1
      %s27 = scalar_select %p24, %s25, %s26
      %p30 = pneg %p24
      %p31 = scmp.eq.s32.totalorder %s15, 3
      %p32 = por %p30, %p31
      %p33 = scmp.ne.s32.totalorder %s25, %s28
      %p34 = scmp.eq.s32.totalorder %s15, 0
      %p35 = por %p33, %p34
      %p36 = scmp.ne.s32.totalorder %s25, %s28
      %p37 = scmp.eq.s32.totalorder %s20, 3
      %p38 = por %p36, %p37
      %p39 = scmp.ne.s32.totalorder %s28, %s29
      %p40 = scmp.eq.s32.totalorder %s20, 0
      %p41 = por %p39, %p40
      %p42 = scmp.ne.s32.totalorder %s28, %s29
      %p43 = scmp.eq.s32.totalorder %s21, 3
      %p44 = por %p42, %p43
      %p46 = scmp.ne.s32.totalorder %s29, %s45
      %p47 = scmp.eq.s32.totalorder %s21, 0
      %p48 = por %p46, %p47
      %s49 = ssub.s32 %s15, %s22
      %p50 = scmp.eq.s32.totalorder %s49, 0
      %s52 = sadd.s32 %s51, 1
      %s53 = scalar_select %p50, %s51, %s52
      %p56 = pneg %p50
      %p57 = scmp.eq.s32.totalorder %s15, 3
      %p58 = por %p56, %p57
      %p59 = scmp.ne.s32.totalorder %s51, %s54
      %p60 = scmp.eq.s32.totalorder %s15, 0
      %p61 = por %p59, %p60
      %p62 = scmp.ne.s32.totalorder %s51, %s54
      %p63 = scmp.eq.s32.totalorder %s20, 3
      %p64 = por %p62, %p63
      %p65 = scmp.ne.s32.totalorder %s54, %s55
      %p66 = scmp.eq.s32.totalorder %s20, 0
      %p67 = por %p65, %p66
      %p68 = scmp.ne.s32.totalorder %s54, %s55
      %p69 = scmp.eq.s32.totalorder %s21, 3
      %p70 = por %p68, %p69
      %p72 = scmp.ne.s32.totalorder %s55, %s71
      %p73 = scmp.eq.s32.totalorder %s21, 0
      %p74 = por %p72, %p73
      %s76 = sadd.s32 %s75, 1
      %p79 = scmp.eq.s32.totalorder %s15, 3
      %p80 = scmp.ne.s32.totalorder %s75, %s77
      %p81 = scmp.eq.s32.totalorder %s15, 0
      %p82 = por %p80, %p81
      %p83 = scmp.ne.s32.totalorder %s75, %s77
      %p84 = scmp.eq.s32.totalorder %s20, 3
      %p85 = por %p83, %p84
      %p86 = scmp.ne.s32.totalorder %s77, %s78
      %p87 = scmp.eq.s32.totalorder %s20, 0
      %p88 = por %p86, %p87
      %p89 = scmp.ne.s32.totalorder %s77, %s78
      %p90 = scmp.eq.s32.totalorder %s21, 3
      %p91 = por %p89, %p90
      %p93 = scmp.ne.s32.totalorder %s78, %s92
      %p94 = scmp.eq.s32.totalorder %s21, 0
      %p95 = por %p93, %p94
      %s97 = sadd.s32 %s96, 1
      %p100 = scmp.eq.s32.totalorder %s15, 3
      %p101 = scmp.ne.s32.totalorder %s96, %s98
      %p102 = scmp.eq.s32.totalorder %s15, 0
      %p103 = por %p101, %p102
      %p104 = scmp.ne.s32.totalorder %s96, %s98
      %p105 = scmp.eq.s32.totalorder %s20, 3
      %p106 = por %p104, %p105
      %p107 = scmp.ne.s32.totalorder %s98, %s99
      %p108 = scmp.eq.s32.totalorder %s20, 0
      %p109 = por %p107, %p108
      %p110 = scmp.ne.s32.totalorder %s98, %s99
      %p111 = scmp.eq.s32.totalorder %s21, 3
      %p112 = por %p110, %p111
      %p114 = scmp.ne.s32.totalorder %s99, %s113
      %p115 = scmp.eq.s32.totalorder %s21, 0
      %p116 = por %p114, %p115
      %s118 = sadd.s32 %s117, 1
      %p121 = scmp.eq.s32.totalorder %s15, 3
      %p122 = scmp.ne.s32.totalorder %s117, %s119
      %p123 = scmp.eq.s32.totalorder %s15, 0
      %p124 = por %p122, %p123
      %p125 = scmp.ne.s32.totalorder %s117, %s119
      %p126 = scmp.eq.s32.totalorder %s20, 3
      %p127 = por %p125, %p126
      %p128 = scmp.ne.s32.totalorder %s119, %s120
      %p129 = scmp.eq.s32.totalorder %s20, 0
      %p130 = por %p128, %p129
      %p131 = scmp.ne.s32.totalorder %s119, %s120
      %p132 = scmp.eq.s32.totalorder %s21, 3
      %p133 = por %p131, %p132
      %p135 = scmp.ne.s32.totalorder %s120, %s134
      %p136 = scmp.eq.s32.totalorder %s21, 0
      %p137 = por %p135, %p136
      %s139 = sadd.s32 %s138, 1
      %p142 = scmp.eq.s32.totalorder %s15, 3
      %p143 = scmp.ne.s32.totalorder %s138, %s140
      %p144 = scmp.eq.s32.totalorder %s15, 0
      %p145 = por %p143, %p144
      %p146 = scmp.ne.s32.totalorder %s138, %s140
      %p147 = scmp.eq.s32.totalorder %s20, 3
      %p148 = por %p146, %p147
      %p149 = scmp.ne.s32.totalorder %s140, %s141
      %p150 = scmp.eq.s32.totalorder %s20, 0
      %p151 = por %p149, %p150
      %p152 = scmp.ne.s32.totalorder %s140, %s141
      %p153 = scmp.eq.s32.totalorder %s21, 3
      %p154 = por %p152, %p153
      %p156 = scmp.ne.s32.totalorder %s141, %s155
      %p157 = scmp.eq.s32.totalorder %s21, 0
      %p158 = por %p156, %p157
      %s160 = sadd.s32 %s159, 1
      %p163 = scmp.eq.s32.totalorder %s15, 3
      %p164 = scmp.ne.s32.totalorder %s159, %s161
      %p165 = scmp.eq.s32.totalorder %s15, 0
      %p166 = por %p164, %p165
      %p167 = scmp.ne.s32.totalorder %s159, %s161
      %p168 = scmp.eq.s32.totalorder %s20, 3
      %p169 = por %p167, %p168
      %p170 = scmp.ne.s32.totalorder %s161, %s162
      %p171 = scmp.eq.s32.totalorder %s20, 0
      %p172 = por %p170, %p171
      %p173 = scmp.ne.s32.totalorder %s161, %s162
      %p174 = scmp.eq.s32.totalorder %s21, 3
      %p175 = por %p173, %p174
      %p177 = scmp.ne.s32.totalorder %s162, %s176
      %p178 = scmp.eq.s32.totalorder %s21, 0
      %p179 = por %p177, %p178
      %s181 = sadd.s32 %s180, 1
      %p184 = scmp.eq.s32.totalorder %s15, 3
      %p185 = scmp.ne.s32.totalorder %s180, %s182
      %p186 = scmp.eq.s32.totalorder %s15, 0
      %p187 = por %p185, %p186
      %p188 = scmp.ne.s32.totalorder %s180, %s182
      %p189 = scmp.eq.s32.totalorder %s20, 3
      %p190 = por %p188, %p189
      %p191 = scmp.ne.s32.totalorder %s182, %s183
      %p192 = scmp.eq.s32.totalorder %s20, 0
      %p193 = por %p191, %p192
      %p194 = scmp.ne.s32.totalorder %s182, %s183
      %p195 = scmp.eq.s32.totalorder %s21, 3
      %p196 = por %p194, %p195
      %p198 = scmp.ne.s32.totalorder %s183, %s197
      %p199 = scmp.eq.s32.totalorder %s21, 0
      %p200 = por %p198, %p199
      %s202 = sadd.s32 %s201, 1
      %p205 = scmp.eq.s32.totalorder %s15, 3
      %p206 = scmp.ne.s32.totalorder %s201, %s203
      %p207 = scmp.eq.s32.totalorder %s15, 0
      %p208 = por %p206, %p207
      %p209 = scmp.ne.s32.totalorder %s201, %s203
      %p210 = scmp.eq.s32.totalorder %s20, 3
      %p211 = por %p209, %p210
      %p212 = scmp.ne.s32.totalorder %s203, %s204
      %p213 = scmp.eq.s32.totalorder %s20, 0
      %p214 = por %p212, %p213
      %p215 = scmp.ne.s32.totalorder %s203, %s204
      %p216 = scmp.eq.s32.totalorder %s21, 3
      %p217 = por %p215, %p216
      %p219 = scmp.ne.s32.totalorder %s204, %s218
      %p220 = scmp.eq.s32.totalorder %s21, 0
      %p221 = por %p219, %p220
      %p222 = scmp.le.s32.totalorder 1, %s15
      %p223 = scmp.lt.s32.totalorder %s15, 5
      %p224 = pnand %p222, %p223
      %p225 = pneg %p224
      // Predicated region
      $region9: #{club_forward.1} parent=5 // pred_check
        _
      $region10: #{club_forward.1} parent=5 // pred_check_branch
        %227 = sbr.rel (%p224) target = $region12
      $region11: #{club_forward.1} parent=5 // pred_region
        %s228 = ssub.s32 %s15, 1
        // Predicated region
        $region13: #{club_forward.1} parent=11 // pred_check
          %p229 = pneg %p88
        $region14: #{club_forward.1} parent=11 // pred_check_branch
          %231 = sbr.rel (%p229) target = $region16
        $region15: #{club_forward.1} parent=11 // pred_region
          _
        $region16: #{club_forward.1} parent=11 // pred_fallthru
          _
        // Predicated region
        $region17: #{club_forward.1} parent=11 // pred_check
          %p232 = pneg %p109
        $region18: #{club_forward.1} parent=11 // pred_check_branch
          %234 = sbr.rel (%p232) target = $region20
        $region19: #{club_forward.1} parent=11 // pred_region
          _
        $region20: #{club_forward.1} parent=11 // pred_fallthru
          _
        // Predicated region
        $region21: #{club_forward.1} parent=11 // pred_check
          %p235 = pneg %p130
        $region22: #{club_forward.1} parent=11 // pred_check_branch
          %237 = sbr.rel (%p235) target = $region24
        $region23: #{club_forward.1} parent=11 // pred_region
          _
        $region24: #{club_forward.1} parent=11 // pred_fallthru
          _
        // Predicated region
        $region25: #{club_forward.1} parent=11 // pred_check
          %p238 = pneg %p151
        $region26: #{club_forward.1} parent=11 // pred_check_branch
          %240 = sbr.rel (%p238) target = $region28
        $region27: #{club_forward.1} parent=11 // pred_region
          _
        $region28: #{club_forward.1} parent=11 // pred_fallthru
          _
        // Predicated region
        $region29: #{club_forward.1} parent=11 // pred_check
          %p241 = pneg %p172
        $region30: #{club_forward.1} parent=11 // pred_check_branch
          %243 = sbr.rel (%p241) target = $region32
        $region31: #{club_forward.1} parent=11 // pred_region
          _
        $region32: #{club_forward.1} parent=11 // pred_fallthru
          _
        // Predicated region
        $region33: #{club_forward.1} parent=11 // pred_check
          %p244 = pneg %p193
        $region34: #{club_forward.1} parent=11 // pred_check_branch
          %246 = sbr.rel (%p244) target = $region36
        $region35: #{club_forward.1} parent=11 // pred_region
          _
        $region36: #{club_forward.1} parent=11 // pred_fallthru
          _
      $region12: #{club_forward.1} parent=5 // pred_fallthru
        _
      %p247 = scmp.lt.s32.totalorder %s15, 4
      // Predicated region
      $region37: #{club_forward.1} parent=5 // pred_check
        %p248 = pneg %p247
      $region38: #{club_forward.1} parent=5 // pred_check_branch
        %250 = sbr.rel (%p248) target = $region40
      $region39: #{club_forward.1} parent=5 // pred_region
        // Predicated region
        $region41: #{club_forward.1} parent=39 // pred_check
          %p251 = pneg %p35
        $region42: #{club_forward.1} parent=39 // pred_check_branch
          %253 = sbr.rel (%p251) target = $region44
        $region43: #{club_forward.1} parent=39 // pred_region
          %s254 = sand.u32 %s25, 1
          %s255 = sand.u32 %s25, 1
          %s256 = smul.addr %s255, 16
          %s257 = scalar_lea.vmem [#allocation3], %s256
          %s258 = smul.addr %s15, 8
          %s259 = scalar_lea.vmem %s0, %s258
          // Predicated region
          $region45: #{club_forward.1} parent=43 // pred_check
            _
          $region46: #{club_forward.1} parent=43 // pred_check_branch
            %261 = sbr.rel (0) target = $region48
          $region47: #{club_forward.1} parent=43 // pred_region
            // Predicated region
            $region49: #{club_forward.1} parent=47 // pred_check
              _
            $region50: #{club_forward.1} parent=47 // pred_check_branch
              %263 = sbr.rel (0) target = $region52
            $region51: #{club_forward.1} parent=47 // pred_region
              // Predicated region
              $region64: #{club_forward.1} parent=51 // pred_check
                _
              $region65: #{club_forward.1} parent=51 // pred_check_branch
                %280 = sbr.rel (0) target = $region67
              $region66: #{club_forward.1} parent=51 // pred_region
                loop: start=0, step=1, limit=1
                $region68: #{club_forward.1} parent=66 // loop_pre_header
                  _
                $region69: #{club_forward.1} parent=66 // loop_header
                  %s282 = sphi 0, %s286
                  %p283 = scmp.ge.s32.totalorder %s282, 1
                  %s287 = sphi %s259, %s259
                  %s288 = sphi %s257, %s257
                $region70: #{club_forward.1} parent=66 // loop_header_branch
                  %285 = sbr.rel (%p283) target = $region74
                $region71: #{club_forward.1} parent=66 // loop_body
                  %v289 = vld [vmem:[%s287] sm:$0xff]
                  %290 = vst [vmem:[%s288] sm:$0xff] %v289
                  %v291 = vld [vmem:[%s287 + $0x20] sm:$0xff]
                  %292 = vst [vmem:[%s288 + $0x8] sm:$0xff] %v291
                $region72: #{club_forward.1} parent=66 // loop_footer
                  %s286 = sadd.s32 1, %s282
                $region73: #{club_forward.1} parent=66 // loop_footer_branch
                  %281 = sbr.rel target = $region69
                $region74: #{club_forward.1} parent=66 // loop_exit
                  _
              $region67: #{club_forward.1} parent=51 // pred_fallthru
                _
              // Predicated region
              $region75: #{club_forward.1} parent=51 // pred_check
                _
              $region76: #{club_forward.1} parent=51 // pred_check_branch
                %294 = sbr.rel target = $region78
              $region77: #{club_forward.1} parent=51 // pred_region
                _
              $region78: #{club_forward.1} parent=51 // pred_fallthru
                _
            $region52: #{club_forward.1} parent=47 // pred_fallthru
              _
            // Predicated region
            $region53: #{club_forward.1} parent=47 // pred_check
              _
            $region54: #{club_forward.1} parent=47 // pred_check_branch
              %265 = sbr.rel target = $region56
            $region55: #{club_forward.1} parent=47 // pred_region
              loop: start=0, step=1, limit=1
              $region57: #{club_forward.1} parent=55 // loop_pre_header
                _
              $region58: #{club_forward.1} parent=55 // loop_header
                %s268 = sphi 0, %s272
                %p269 = scmp.ge.s32.totalorder %s268, 1
                %s273 = sphi %s259, %s259
                %s274 = sphi %s257, %s257
              $region59: #{club_forward.1} parent=55 // loop_header_branch
                %271 = sbr.rel (%p269) target = $region63
              $region60: #{club_forward.1} parent=55 // loop_body
                %v275 = vld [vmem:[%s273] sm:$0xff]
                %276 = vst [vmem:[%s274] sm:$0xff] %v275
                %v277 = vld [vmem:[%s273 + $0x20] sm:$0xff]
                %278 = vst [vmem:[%s274 + $0x8] sm:$0xff] %v277
              $region61: #{club_forward.1} parent=55 // loop_footer
                %s272 = sadd.s32 1, %s268
              $region62: #{club_forward.1} parent=55 // loop_footer_branch
                %267 = sbr.rel target = $region58
              $region63: #{club_forward.1} parent=55 // loop_exit
                _
            $region56: #{club_forward.1} parent=47 // pred_fallthru
              _
          $region48: #{club_forward.1} parent=43 // pred_fallthru
            _
          %295 = vnop
        $region44: #{club_forward.1} parent=39 // pred_fallthru
          _
        // Predicated region
        $region79: #{club_forward.1} parent=39 // pred_check
          %p296 = pneg %p61
        $region80: #{club_forward.1} parent=39 // pred_check_branch
          %298 = sbr.rel (%p296) target = $region82
        $region81: #{club_forward.1} parent=39 // pred_region
          %s299 = sand.u32 %s51, 1
          %s300 = sand.u32 %s51, 1
          %s301 = smul.addr %s300, 16
          %s302 = scalar_lea.vmem [#allocation4], %s301
          %s303 = smul.addr %s15, 8
          %s304 = scalar_lea.vmem %s1, %s303
          // Predicated region
          $region83: #{club_forward.1} parent=81 // pred_check
            _
          $region84: #{club_forward.1} parent=81 // pred_check_branch
            %306 = sbr.rel (0) target = $region86
          $region85: #{club_forward.1} parent=81 // pred_region
            // Predicated region
            $region87: #{club_forward.1} parent=85 // pred_check
              _
            $region88: #{club_forward.1} parent=85 // pred_check_branch
              %308 = sbr.rel (0) target = $region90
            $region89: #{club_forward.1} parent=85 // pred_region
              // Predicated region
              $region102: #{club_forward.1} parent=89 // pred_check
                _
              $region103: #{club_forward.1} parent=89 // pred_check_branch
                %325 = sbr.rel (0) target = $region105
              $region104: #{club_forward.1} parent=89 // pred_region
                loop: start=0, step=1, limit=1
                $region106: #{club_forward.1} parent=104 // loop_pre_header
                  _
                $region107: #{club_forward.1} parent=104 // loop_header
                  %s327 = sphi 0, %s331
                  %p328 = scmp.ge.s32.totalorder %s327, 1
                  %s332 = sphi %s304, %s304
                  %s333 = sphi %s302, %s302
                $region108: #{club_forward.1} parent=104 // loop_header_branch
                  %330 = sbr.rel (%p328) target = $region112
                $region109: #{club_forward.1} parent=104 // loop_body
                  %v334 = vld [vmem:[%s332] sm:$0xff]
                  %335 = vst [vmem:[%s333] sm:$0xff] %v334
                  %v336 = vld [vmem:[%s332 + $0x20] sm:$0xff]
                  %337 = vst [vmem:[%s333 + $0x8] sm:$0xff] %v336
                $region110: #{club_forward.1} parent=104 // loop_footer
                  %s331 = sadd.s32 1, %s327
                $region111: #{club_forward.1} parent=104 // loop_footer_branch
                  %326 = sbr.rel target = $region107
                $region112: #{club_forward.1} parent=104 // loop_exit
                  _
              $region105: #{club_forward.1} parent=89 // pred_fallthru
                _
              // Predicated region
              $region113: #{club_forward.1} parent=89 // pred_check
                _
              $region114: #{club_forward.1} parent=89 // pred_check_branch
                %339 = sbr.rel target = $region116
              $region115: #{club_forward.1} parent=89 // pred_region
                _
              $region116: #{club_forward.1} parent=89 // pred_fallthru
                _
            $region90: #{club_forward.1} parent=85 // pred_fallthru
              _
            // Predicated region
            $region91: #{club_forward.1} parent=85 // pred_check
              _
            $region92: #{club_forward.1} parent=85 // pred_check_branch
              %310 = sbr.rel target = $region94
            $region93: #{club_forward.1} parent=85 // pred_region
              loop: start=0, step=1, limit=1
              $region95: #{club_forward.1} parent=93 // loop_pre_header
                _
              $region96: #{club_forward.1} parent=93 // loop_header
                %s313 = sphi 0, %s317
                %p314 = scmp.ge.s32.totalorder %s313, 1
                %s318 = sphi %s304, %s304
                %s319 = sphi %s302, %s302
              $region97: #{club_forward.1} parent=93 // loop_header_branch
                %316 = sbr.rel (%p314) target = $region101
              $region98: #{club_forward.1} parent=93 // loop_body
                %v320 = vld [vmem:[%s318] sm:$0xff]
                %321 = vst [vmem:[%s319] sm:$0xff] %v320
                %v322 = vld [vmem:[%s318 + $0x20] sm:$0xff]
                %323 = vst [vmem:[%s319 + $0x8] sm:$0xff] %v322
              $region99: #{club_forward.1} parent=93 // loop_footer
                %s317 = sadd.s32 1, %s313
              $region100: #{club_forward.1} parent=93 // loop_footer_branch
                %312 = sbr.rel target = $region96
              $region101: #{club_forward.1} parent=93 // loop_exit
                _
            $region94: #{club_forward.1} parent=85 // pred_fallthru
              _
          $region86: #{club_forward.1} parent=81 // pred_fallthru
            _
          %340 = vnop
        $region82: #{club_forward.1} parent=39 // pred_fallthru
          _
      $region40: #{club_forward.1} parent=5 // pred_fallthru
        _
      %p341 = scmp.le.s32.totalorder 1, %s15
      %p342 = scmp.lt.s32.totalorder %s15, 5
      %p343 = pnand %p341, %p342
      %p344 = pneg %p343
      // Predicated region
      $region117: #{club_forward.1} parent=5 // pred_check
        _
      $region118: #{club_forward.1} parent=5 // pred_check_branch
        %346 = sbr.rel (%p343) target = $region120
      $region119: #{club_forward.1} parent=5 // pred_region
        %s347 = ssub.s32 %s15, 1
        %s348 = sand.u32 %s28, 1
        %s349 = sand.u32 %s28, 1
        %s350 = smul.addr %s349, 16
        %s351 = scalar_lea.vmem [#allocation3], %s350
        // Predicated region
        $region121: #{club_forward.1} parent=119 // pred_check
          %p352 = pneg %p41
        $region122: #{club_forward.1} parent=119 // pred_check_branch
          %354 = sbr.rel (%p352) target = $region124
        $region123: #{club_forward.1} parent=119 // pred_region
          _
        $region124: #{club_forward.1} parent=119 // pred_fallthru
          _
        %s355 = sand.u32 %s54, 1
        %s356 = sand.u32 %s54, 1
        %s357 = smul.addr %s356, 16
        %s358 = scalar_lea.vmem [#allocation4], %s357
        // Predicated region
        $region125: #{club_forward.1} parent=119 // pred_check
          %p359 = pneg %p67
        $region126: #{club_forward.1} parent=119 // pred_check_branch
          %361 = sbr.rel (%p359) target = $region128
        $region127: #{club_forward.1} parent=119 // pred_region
          _
        $region128: #{club_forward.1} parent=119 // pred_fallthru
          _
        %s362 = sand.u32 %s28, 1
        %s363 = sand.u32 %s28, 1
        %s364 = smul.addr %s363, 16
        %s365 = scalar_lea.vmem [#allocation3], %s364
        %p366 = pneg %p41
        %p367 = pneg %p38
        %s368 = sand.u32 %s54, 1
        %s369 = sand.u32 %s54, 1
        %s370 = smul.addr %s369, 16
        %s371 = scalar_lea.vmem [#allocation4], %s370
        %p372 = pneg %p67
        %p373 = pneg %p64
        %p374 = pneg %p88
        %p375 = pneg %p85
        %p376 = pneg %p109
        %p377 = pneg %p106
        %p378 = pneg %p130
        %p379 = pneg %p127
        %p380 = pneg %p151
        %p381 = pneg %p148
        %p382 = pneg %p172
        %p383 = pneg %p169
        %p384 = pneg %p193
        %p385 = pneg %p190
        %p386 = pneg %p214
        %p387 = pneg %p211
        %p388 = scmp.eq.s32.totalorder %s20, 0
        // Predicated region
        $region129: #{club_forward.1} parent=119 // pred_check
          %p389 = pneg %p388
        $region130: #{club_forward.1} parent=119 // pred_check_branch
          %391 = sbr.rel (%p389) target = $region132
        $region131: #{club_forward.1} parent=119 // pred_region
          %392 = vst [vmem:[#allocation2] sm:$0xff] 0.0
          %393 = vst [vmem:[#allocation2 + $0x8] sm:$0xff] 0.0
        $region132: #{club_forward.1} parent=119 // pred_fallthru
          _
        %v394 = vld [vmem:[%s351] sm:$0xff]
        %v395 = vld [vmem:[%s351 + $0x8] sm:$0xff]
        %v396 = vld [vmem:[%s358] sm:$0xff]
        %v397 = vld [vmem:[%s358 + $0x8] sm:$0xff]
        %v398 = vld [vmem:[%s2] sm:$0xff]
        %v399 = vld [vmem:[%s2 + $0x8] sm:$0xff]
        %v400 = vld [vmem:[%s2 + $0x10] sm:$0xff]
        %v401 = vld [vmem:[%s2 + $0x18] sm:$0xff]
        %v402 = vld [vmem:[%s3] sm:$0xff]
        %v403 = vld [vmem:[%s3 + $0x8] sm:$0xff]
        %v404 = vld [vmem:[%s3 + $0x10] sm:$0xff]
        %v405 = vld [vmem:[%s3 + $0x18] sm:$0xff]
        %407 = vset.pattern.permute.xlu0 0
        %408 = vperm.xlu0 %407, %v402
        %v409 = vpop.permute.xlu0 %408
        %412 = vset.pattern.permute.xlu0 0
        %413 = vperm.xlu0 %412, %v403
        %v414 = vpop.permute.xlu0 %413
        %417 = vset.pattern.permute.xlu0 0
        %418 = vperm.xlu0 %417, %v404
        %v419 = vpop.permute.xlu0 %418
        %422 = vset.pattern.permute.xlu0 0
        %423 = vperm.xlu0 %422, %v405
        %v424 = vpop.permute.xlu0 %423
        %vm426 = vcmask 130048
        %v428 = vsel %vm426, %v398, 0
        %v431 = vsel %vm426, %v399, 0
        %v434 = vsel %vm426, %v400, 0
        %v437 = vsel %vm426, %v401, 0
        %439 = vmatprep.subr.mxu0 0.0
        %440 = vmatpush1.msra.mxu0 %v394
        %441 = vmatprep.subr.mxu0 0.0
        %442 = vmatpush1.msra.mxu0 %v395
        %443 = vmatprep.subr.mxu0 0.0
        %444 = vmatpush1.msra.mxu0 0.0
        %445 = vmatprep.subr.mxu0 0.0
        %446 = vmatpush1.msra.mxu0 0.0
        %447 = vmatprep.subr.mxu0 0.0
        %448 = vmatpush1.msra.mxu0 0.0
        %449 = vmatprep.subr.mxu0 0.0
        %450 = vmatpush1.msra.mxu0 0.0
        %451 = vmatprep.subr.mxu0 0.0
        %452 = vmatpush1.msra.mxu0 0.0
        %453 = vmatprep.subr.mxu0 0.0
        %454 = vmatpush1.msra.mxu0 0.0
        %455 = vmatprep.subr.mxu0 0.0
        %456 = vmatpush1.msra.mxu0 0.0
        %457 = vmatprep.subr.mxu0 0.0
        %458 = vmatpush1.msra.mxu0 0.0
        %459 = vmatprep.subr.mxu0 0.0
        %460 = vmatpush1.msra.mxu0 0.0
        %461 = vmatprep.subr.mxu0 0.0
        %462 = vmatpush1.msra.mxu0 0.0
        %463 = vmatprep.subr.mxu0 0.0
        %464 = vmatpush1.msra.mxu0 0.0
        %465 = vmatprep.subr.mxu0 0.0
        %466 = vmatpush1.msra.mxu0 0.0
        %467 = vmatprep.subr.mxu0 0.0
        %468 = vmatpush1.msra.mxu0 0.0
        %469 = vmatprep.subr.mxu0 0.0
        %470 = vmatpush1.msra.mxu0 0.0
        %471 = vmatprep.subr.mxu0 0.0
        %472 = vmatpush1.msra.mxu0 0.0
        %473 = vmatprep.subr.mxu0 0.0
        %474 = vmatpush1.msra.mxu0 0.0
        %475 = vmatprep.subr.mxu0 0.0
        %476 = vmatpush1.msra.mxu0 0.0
        %477 = vmatprep.subr.mxu0 0.0
        %478 = vmatpush1.msra.mxu0 0.0
        %479 = vmatprep.subr.mxu0 0.0
        %480 = vmatpush1.msra.mxu0 0.0
        %481 = vmatprep.subr.mxu0 0.0
        %482 = vmatpush1.msra.mxu0 0.0
        %483 = vmatprep.subr.mxu0 0.0
        %484 = vmatpush1.msra.mxu0 0.0
        %485 = vmatprep.subr.mxu0 0.0
        %486 = vmatpush1.msra.mxu0 0.0
        %487 = vmatprep.subr.mxu0 0.0
        %488 = vmatpush1.msra.mxu0 0.0
        %489 = vmatprep.subr.mxu0 0.0
        %490 = vmatpush1.msra.mxu0 0.0
        %491 = vmatprep.subr.mxu0 0.0
        %492 = vmatpush1.msra.mxu0 0.0
        %493 = vmatprep.subr.mxu0 0.0
        %494 = vmatpush1.msra.mxu0 0.0
        %495 = vmatprep.subr.mxu0 0.0
        %496 = vmatpush1.msra.mxu0 0.0
        %497 = vmatprep.subr.mxu0 0.0
        %498 = vmatpush1.msra.mxu0 0.0
        %499 = vmatprep.subr.mxu0 0.0
        %500 = vmatpush1.msra.mxu0 0.0
        %501 = vmatprep.subr.mxu0 0.0
        %502 = vmatpush1.msra.mxu0 0.0
        %503 = vmatprep.mubr.f32.mxu0 0.0
        %504 = vmatmul.mubr.f32.gmra.mrb[0].mxu0 %v428
        %v505 = vpop.f32.mrb[0].mxu0
        %v506 = vadd.f32 %v409, %v505
        %v507 = vpop.f32.mrb[0].mxu0
        %508 = vmatprep.mubr.f32.mxu0 0.0
        %509 = vmatmul.mubr.f32.gmra.mrb[0].mxu0 %v431
        %v510 = vpop.f32.mrb[0].mxu0
        %v511 = vadd.f32 %v414, %v510
        %v512 = vpop.f32.mrb[0].mxu0
        %513 = vmatprep.mubr.f32.mxu0 0.0
        %514 = vmatmul.mubr.f32.gmra.mrb[0].mxu0 %v434
        %v515 = vpop.f32.mrb[0].mxu0
        %v516 = vadd.f32 %v419, %v515
        %v517 = vpop.f32.mrb[0].mxu0
        %518 = vmatprep.mubr.f32.mxu0 0.0
        %519 = vmatmul.mubr.f32.gmra.mrb[0].mxu0 %v437
        %v520 = vpop.f32.mrb[0].mxu0
        %v521 = vadd.f32 %v424, %v520
        %v522 = vpop.f32.mrb[0].mxu0
        %523 = vdwg.mxu0
        %v524 = vmax.f32 %v506, 0.0
        %v525 = vmax.f32 %v511, 0.0
        %v526 = vmax.f32 %v516, 0.0
        %v527 = vmax.f32 %v521, 0.0
        %v528 = vld [vmem:[%s4] sm:$0xff]
        %v529 = vld [vmem:[%s4 + $0x8] sm:$0xff]
        %v530 = vld [vmem:[%s4 + $0x10] sm:$0xff]
        %v531 = vld [vmem:[%s4 + $0x18] sm:$0xff]
        %v532 = vld [vmem:[%s5] sm:$0xff]
        %v533 = vld [vmem:[%s5 + $0x8] sm:$0xff]
        %v534 = vld [vmem:[%s5 + $0x10] sm:$0xff]
        %v535 = vld [vmem:[%s5 + $0x18] sm:$0xff]
        %537 = vset.pattern.permute.xlu0 0
        %538 = vperm.xlu0 %537, %v532
        %v539 = vpop.permute.xlu0 %538
        %542 = vset.pattern.permute.xlu0 0
        %543 = vperm.xlu0 %542, %v533
        %v544 = vpop.permute.xlu0 %543
        %547 = vset.pattern.permute.xlu0 0
        %548 = vperm.xlu0 %547, %v534
        %v549 = vpop.permute.xlu0 %548
        %552 = vset.pattern.permute.xlu0 0
        %553 = vperm.xlu0 %552, %v535
        %v554 = vpop.permute.xlu0 %553
        %vm556 = vcmask 261120
        %v558 = vsel %vm556, %v528, 0
        %v561 = vsel %vm556, %v529, 0
        %v564 = vsel %vm556, %v530, 0
        %v567 = vsel %vm556, %v531, 0
        %569 = vmatprep.subr.mxu0 0.0
        %570 = vmatpush1.msra.mxu0 %v524
        %571 = vmatprep.subr.mxu0 0.0
        %572 = vmatpush1.msra.mxu0 %v525
        %573 = vmatprep.subr.mxu0 0.0
        %574 = vmatpush1.msra.mxu0 %v526
        %575 = vmatprep.subr.mxu0 0.0
        %576 = vmatpush1.msra.mxu0 %v527
        %577 = vmatprep.subr.mxu0 0.0
        %578 = vmatpush1.msra.mxu0 0.0
        %579 = vmatprep.subr.mxu0 0.0
        %580 = vmatpush1.msra.mxu0 0.0
        %581 = vmatprep.subr.mxu0 0.0
        %582 = vmatpush1.msra.mxu0 0.0
        %583 = vmatprep.subr.mxu0 0.0
        %584 = vmatpush1.msra.mxu0 0.0
        %585 = vmatprep.subr.mxu0 0.0
        %586 = vmatpush1.msra.mxu0 0.0
        %587 = vmatprep.subr.mxu0 0.0
        %588 = vmatpush1.msra.mxu0 0.0
        %589 = vmatprep.subr.mxu0 0.0
        %590 = vmatpush1.msra.mxu0 0.0
        %591 = vmatprep.subr.mxu0 0.0
        %592 = vmatpush1.msra.mxu0 0.0
        %593 = vmatprep.subr.mxu0 0.0
        %594 = vmatpush1.msra.mxu0 0.0
        %595 = vmatprep.subr.mxu0 0.0
        %596 = vmatpush1.msra.mxu0 0.0
        %597 = vmatprep.subr.mxu0 0.0
        %598 = vmatpush1.msra.mxu0 0.0
        %599 = vmatprep.subr.mxu0 0.0
        %600 = vmatpush1.msra.mxu0 0.0
        %601 = vmatprep.subr.mxu0 0.0
        %602 = vmatpush1.msra.mxu0 0.0
        %603 = vmatprep.subr.mxu0 0.0
        %604 = vmatpush1.msra.mxu0 0.0
        %605 = vmatprep.subr.mxu0 0.0
        %606 = vmatpush1.msra.mxu0 0.0
        %607 = vmatprep.subr.mxu0 0.0
        %608 = vmatpush1.msra.mxu0 0.0
        %609 = vmatprep.subr.mxu0 0.0
        %610 = vmatpush1.msra.mxu0 0.0
        %611 = vmatprep.subr.mxu0 0.0
        %612 = vmatpush1.msra.mxu0 0.0
        %613 = vmatprep.subr.mxu0 0.0
        %614 = vmatpush1.msra.mxu0 0.0
        %615 = vmatprep.subr.mxu0 0.0
        %616 = vmatpush1.msra.mxu0 0.0
        %617 = vmatprep.subr.mxu0 0.0
        %618 = vmatpush1.msra.mxu0 0.0
        %619 = vmatprep.subr.mxu0 0.0
        %620 = vmatpush1.msra.mxu0 0.0
        %621 = vmatprep.subr.mxu0 0.0
        %622 = vmatpush1.msra.mxu0 0.0
        %623 = vmatprep.subr.mxu0 0.0
        %624 = vmatpush1.msra.mxu0 0.0
        %625 = vmatprep.subr.mxu0 0.0
        %626 = vmatpush1.msra.mxu0 0.0
        %627 = vmatprep.subr.mxu0 0.0
        %628 = vmatpush1.msra.mxu0 0.0
        %629 = vmatprep.subr.mxu0 0.0
        %630 = vmatpush1.msra.mxu0 0.0
        %631 = vmatprep.subr.mxu0 0.0
        %632 = vmatpush1.msra.mxu0 0.0
        %633 = vmatprep.mubr.f32.mxu0 0.0
        %634 = vmatmul.mubr.f32.gmra.mrb[0].mxu0 %v558
        %v635 = vpop.f32.mrb[0].mxu0
        %v636 = vadd.f32 %v539, %v635
        %v637 = vpop.f32.mrb[0].mxu0
        %638 = vmatprep.mubr.f32.mxu0 0.0
        %639 = vmatmul.mubr.f32.gmra.mrb[0].mxu0 %v561
        %v640 = vpop.f32.mrb[0].mxu0
        %v641 = vadd.f32 %v544, %v640
        %v642 = vpop.f32.mrb[0].mxu0
        %643 = vmatprep.mubr.f32.mxu0 0.0
        %644 = vmatmul.mubr.f32.gmra.mrb[0].mxu0 %v564
        %v645 = vpop.f32.mrb[0].mxu0
        %v646 = vadd.f32 %v549, %v645
        %v647 = vpop.f32.mrb[0].mxu0
        %648 = vmatprep.mubr.f32.mxu0 0.0
        %649 = vmatmul.mubr.f32.gmra.mrb[0].mxu0 %v567
        %v650 = vpop.f32.mrb[0].mxu0
        %v651 = vadd.f32 %v554, %v650
        %v652 = vpop.f32.mrb[0].mxu0
        %653 = vdwg.mxu0
        %v654 = vtanh.pop %v646
        %v655 = vtanh.pop %v651
        %v656 = vsub.f32 0.0, %v654
        %v657 = vsub.f32 0.0, %v655
        %v658 = vmul.f32 %v656, 1.442695
        %v659 = vpow.pop %v658
        %v660 = vmul.f32 %v657, 1.442695
        %v661 = vpow.pop %v660
        %v662 = vld [vmem:[%s6] sm:$0xff]
        %v663 = vld [vmem:[%s6 + $0x8] sm:$0xff]
        %665 = vset.pattern.permute.xlu0 0
        %666 = vperm.xlu0 %665, %v662
        %v667 = vpop.permute.xlu0 %666
        %670 = vset.pattern.permute.xlu0 0
        %671 = vperm.xlu0 %670, %v663
        %v672 = vpop.permute.xlu0 %671
        %v674 = vsub.f32 %v396, %v667
        %v675 = vsub.f32 %v397, %v672
        %v676 = vsub.f32 %v636, %v667
        %v677 = vsub.f32 %v641, %v672
        %v678 = vld [vmem:[#allocation2] sm:$0xff]
        %v679 = vld [vmem:[#allocation2 + $0x8] sm:$0xff]
        %v680 = vmul.f32 %v674, %v674
        %v681 = vmul.f32 %v675, %v675
        %v682 = vld [vmem:[%s7] sm:$0xff]
        %v683 = vld [vmem:[%s7 + $0x8] sm:$0xff]
        %685 = vset.pattern.permute.xlu0 0
        %686 = vperm.xlu0 %685, %v682
        %v687 = vpop.permute.xlu0 %686
        %690 = vset.pattern.permute.xlu0 0
        %691 = vperm.xlu0 %690, %v683
        %v692 = vpop.permute.xlu0 %691
        %v694 = vsub.f32 %v680, %v687
        %v695 = vsub.f32 %v681, %v692
        %v696 = vmul.f32 %v676, 2.0
        %v697 = vmul.f32 %v677, 2.0
        %v698 = vmul.f32 %v696, %v674
        %v699 = vmul.f32 %v697, %v675
        %v700 = vsub.f32 %v694, %v698
        %v701 = vsub.f32 %v695, %v699
        %v702 = vmul.f32 %v659, %v700
        %v703 = vmul.f32 %v661, %v701
        %v704 = vadd.f32 %v678, %v702
        %v705 = vadd.f32 %v679, %v703
        %706 = vst [vmem:[#allocation2] sm:$0xff] %v704
        %707 = vst [vmem:[#allocation2 + $0x8] sm:$0xff] %v705
        %p708 = scmp.eq.s32.totalorder %s20, 3
        // Predicated region
        $region133: #{club_forward.1} parent=119 // pred_check
          %p709 = pneg %p708
        $region134: #{club_forward.1} parent=119 // pred_check_branch
          %711 = sbr.rel (%p709) target = $region136
        $region135: #{club_forward.1} parent=119 // pred_region
          %v712 = vld [vmem:[#allocation2] sm:$0xff]
          %v713 = vld [vmem:[#allocation2 + $0x8] sm:$0xff]
          %v714 = vadd.f32 %v712, %v713
          %715 = vadd.xlane.f32.xlu0 %v714
          %v716 = vpop.xlane.xlu0 %715
          %v717 = vrot.slane %v716, 4
          %v718 = vadd.f32 %v716, %v717
          %v719 = vrot.slane %v718, 2
          %v720 = vadd.f32 %v718, %v719
          %v721 = vrot.slane %v720, 1
          %v722 = vadd.f32 %v720, %v721
          %s723 = vtos %v722
          %v724 = vstv %s723
          %v725 = vmul.f32 %v724, -0.0009765625
          %vm726 = vcmask 0
          %727 = vst.msk [vmem:[#allocation5] sm:$0x1] %vm726, %v725
        $region136: #{club_forward.1} parent=119 // pred_fallthru
          _
        // Predicated region
        $region137: #{club_forward.1} parent=119 // pred_check
          %p728 = pneg %p211
        $region138: #{club_forward.1} parent=119 // pred_check_branch
          %730 = sbr.rel (%p728) target = $region140
        $region139: #{club_forward.1} parent=119 // pred_region
          %s732 = ssub.s32 16, 16
          %733 = vsyncadd [#allocation6], %s732
          %s735 = sshll.u32 [#allocation5], 4
          %s736 = int_to_ptr.vmem [resolvable:$true] %s735
          %738 = dma.vmem_to_hbm [thread:$0]  %s736, 16, %s8, [#allocation6]
        $region140: #{club_forward.1} parent=119 // pred_fallthru
          _
        // Predicated region
        $region141: #{club_forward.1} parent=119 // pred_check
          %p739 = pneg %p211
        $region142: #{club_forward.1} parent=119 // pred_check_branch
          %741 = sbr.rel (%p739) target = $region144
        $region143: #{club_forward.1} parent=119 // pred_region
          %742 = dma.done [#allocation6], 16
        $region144: #{club_forward.1} parent=119 // pred_fallthru
          _
      $region120: #{club_forward.1} parent=5 // pred_fallthru
        _
      %p743 = scmp.le.s32.totalorder 2, %s15
      // Predicated region
      $region145: #{club_forward.1} parent=5 // pred_check
        %p744 = pneg %p743
      $region146: #{club_forward.1} parent=5 // pred_check_branch
        %746 = sbr.rel (%p744) target = $region148
      $region147: #{club_forward.1} parent=5 // pred_region
        %s747 = ssub.s32 %s15, 2
      $region148: #{club_forward.1} parent=5 // pred_fallthru
        _
    $region6: #{club_forward.1} parent=1 // loop_footer
      %s19 = sadd.s32 1, %s15
    $region7: #{club_forward.1} parent=1 // loop_footer_branch
      %14 = sbr.rel target = $region3
    $region8: #{club_forward.1} parent=1 // loop_exit
      _
    %748 = vsyncpa [#allocation6], 1
    %s749 = scalar_lea.sflag [#allocation6], 1
    %750 = vsyncpa %s749, 1

</llo_original>
